<compile_context>
chip_gen: v7x
topology: tpu7x:2x2x1
jax: 0.10.0
libtpu: 0.0.40
codegen_flags: <defaults>
</compile_context>

<pallas_src>
import functools

import numpy as np
import jax
import jax.numpy as jnp
from jax.experimental import pallas as pl
from jax.experimental.pallas import tpu as pltpu

K = 3            # kernel_size (module default)
PAD = 1          # padding (module default, applied via ZeroPad2d)
EPS = 1e-5       # nn.InstanceNorm2d default eps
NEG_SLOPE = 0.2  # nn.LeakyReLU(0.2)
SUBLANE = 8      # f32 sublane tile


def _round_up(x, m):
    return (x + m - 1) // m * m


def conv_block_kernel(x_ref, w_ref, m_ref, o_ref, *, batch, width):
    # x_ref: (batch, Cin_pad, HW)  flattened, channel-padded NCHW input
    # w_ref: (Cout, K*K*Cin_pad)   conv weights, rows ordered (kh, kw, ci)
    # m_ref: (K*K*Cin_pad, HW)     precomputed {0,1} halo masks (grid-invariant)
    # o_ref: (batch, Cout, HW)     lane-dense, already NCHW-ordered output
    hw = x_ref.shape[-1]
    cout = w_ref.shape[0]
    inv_hw = 1.0 / hw

    w = w_ref[...].astype(jnp.float32)     # (Cout, K*K*Cin_pad), loaded once
    halo = m_ref[...]                      # (K*K*Cin_pad, HW),   loaded once

    for b in range(batch):                 # small static unroll: amortizes grid overhead
        x = x_ref[b].astype(jnp.float32)   # (Cin_pad, HW)

        # im2col patch: 9 lane-rolled copies of the flat input (XLU slot); the
        # ZeroPad2d halo (and any roll wrap) is zeroed by ONE fused multiply with
        # the precomputed mask.
        taps = []
        for kh in range(K):
            for kw in range(K):
                shift = (kh - PAD) * width + (kw - PAD)
                taps.append(x if shift == 0
                            else pltpu.roll(x, shift=(-shift) % hw, axis=1))
        patch = jnp.concatenate(taps, axis=0) * halo            # (K*K*Cin_pad, HW)

        # Single MXU contraction (f32 accumulate). Conv bias is intentionally
        # omitted: InstanceNorm2d(affine=False) cancels any per-channel constant.
        acc = jnp.dot(w, patch, preferred_element_type=jnp.float32)   # (Cout, HW)

        # InstanceNorm2d: sum and sum-of-squares in one cross-lane reduce pass.
        stacked = jnp.concatenate([acc, acc * acc], axis=0)           # (2*Cout, HW)
        sums = jnp.sum(stacked, axis=1, keepdims=True) * inv_hw       # (2*Cout, 1)
        mean = sums[:cout]
        var = sums[cout:] - mean * mean                               # biased variance
        y = (acc - mean) * jax.lax.rsqrt(var + EPS)

        # LeakyReLU(0.2): single max, no cmp+select.
        y = jnp.maximum(y, NEG_SLOPE * y)

        o_ref[b] = y.astype(o_ref.dtype)   # unmasked, lane-dense store


def conv_block(x_nchw, weight, bias=None, *, samples_per_step=None):
    """ConvBlock forward. x_nchw: (N,Cin,H,W); weight: (Cout,Cin,K,K) OIHW.

    `bias` is accepted for API parity but not used: InstanceNorm2d(affine=False)
    subtracts the per-channel mean, so a per-channel conv bias is a no-op on the
    block's output (the reference below keeps it and still matches).
    """
    del bias
    N, Cin, H, W = x_nchw.shape
    Cout = weight.shape[0]
    HW = H * W
    assert HW % 128 == 0, "H*W must be a multiple of 128 (pad/tile W otherwise)"
    # TODO(synk): for H*W not a multiple of 128, pad the lane axis in the wrapper
    # (and extend the halo mask) to keep stores unmasked and rolls aligned.

    # Pad Cin to the f32 sublane tile so the in-kernel 9-way concatenate is pure
    # tile-aligned appends.
    Cin_pad = _round_up(max(Cin, SUBLANE), SUBLANE)

    x_flat = x_nchw.reshape(N, Cin, HW)                       # free metadata reshape
    if Cin_pad != Cin:
        x_flat = jnp.pad(x_flat, ((0, 0), (0, Cin_pad - Cin), (0, 0)))

    # OIHW (co,ci,kh,kw) -> (co,kh,kw,ci) -> (Cout, K*K*Cin_pad), matching the
    # (kh, kw, ci) row order of the in-kernel patch matrix.
    w_khwc = jnp.transpose(weight, (0, 2, 3, 1))
    if Cin_pad != Cin:
        w_khwc = jnp.pad(w_khwc, ((0, 0), (0, 0), (0, 0), (0, Cin_pad - Cin)))
    w_mat = w_khwc.reshape(Cout, K * K * Cin_pad)

    # Constant halo masks: 1 where the tap's source pixel is inside the un-padded
    # image, 0 where the ZeroPad2d halo (or a roll wrap) would be read. Expanded to
    # (K*K*Cin_pad, HW) so the kernel applies it with a single aligned multiply.
    pos = np.arange(HW)
    row, col = pos // W, pos % W
    mask_rows = []
    for kh in range(K):
        for kw in range(K):
            dh, dw = kh - PAD, kw - PAD
            m = np.ones(HW, dtype=np.float32)
            if dh < 0:
                m *= (row >= -dh)
            elif dh > 0:
                m *= (row < H - dh)
            if dw < 0:
                m *= (col >= -dw)
            elif dw > 0:
                m *= (col < W - dw)
            mask_rows.append(np.broadcast_to(m, (Cin_pad, HW)))
    halo = jnp.asarray(np.concatenate(mask_rows, axis=0))     # (K*K*Cin_pad, HW)

    if samples_per_step is None:
        # Amortize per-grid-step overhead for big batches, but keep >= 2 grid steps
        # so both v7x TensorCores get work (v5e/v6e are single-TC, so no downside).
        samples_per_step = N // 2 if (N >= 4 and N % 2 == 0) else 1
    assert N % samples_per_step == 0
    B = samples_per_step
    KKC = K * K * Cin_pad

    kernel = functools.partial(conv_block_kernel, batch=B, width=W)

    out = pl.pallas_call(
        kernel,
        out_shape=jax.ShapeDtypeStruct((N, Cout, HW), x_nchw.dtype),
        grid_spec=pltpu.PrefetchScalarGridSpec(
            num_scalar_prefetch=0,
            grid=(N // B,),
            in_specs=[
                pl.BlockSpec((B, Cin_pad, HW), lambda n: (n, 0, 0)),
                pl.BlockSpec((Cout, KKC), lambda n: (0, 0)),
                pl.BlockSpec((KKC, HW), lambda n: (0, 0)),
            ],
            out_specs=pl.BlockSpec((B, Cout, HW), lambda n: (n, 0, 0)),
        ),
        compiler_params=pltpu.CompilerParams(
            dimension_semantics=("parallel",)),
    )(x_flat, w_mat, halo)

    return out.reshape(N, Cout, H, W)                         # free reshape, no transpose


def reference(x_nchw, weight, bias):
    """Plain-JAX reference of the ConvBlock forward (matches the PyTorch module)."""
    xp = jnp.pad(x_nchw, ((0, 0), (0, 0), (PAD, PAD), (PAD, PAD)))
    y = jax.lax.conv_general_dilated(
        xp, weight, window_strides=(1, 1), padding='VALID',
        dimension_numbers=('NCHW', 'OIHW', 'NCHW'))
    y = y + bias.reshape(1, -1, 1, 1)
    mean = jnp.mean(y, axis=(2, 3), keepdims=True)
    var = jnp.mean((y - mean) ** 2, axis=(2, 3), keepdims=True)
    y = (y - mean) * jax.lax.rsqrt(var + EPS)
    return jnp.where(y > 0, y, NEG_SLOPE * y)


if __name__ == "__main__":
    # Small shapes consistent with the module: batch=2, in_channels=4,
    # out_channels=8, spatial=16x16.
    N, CIN, COUT, H, W = 2, 4, 8, 16, 16

    key = jax.random.PRNGKey(0)
    kx, kw, kb = jax.random.split(key, 3)

    x = jax.random.normal(kx, (N, CIN, H, W), dtype=jnp.float32)
    bound = 1.0 / jnp.sqrt(CIN * K * K)
    weight = jax.random.uniform(kw, (COUT, CIN, K, K), jnp.float32,
                                minval=-bound, maxval=bound)
    bias = jax.random.uniform(kb, (COUT,), jnp.float32,
                              minval=-bound, maxval=bound)

    out = jax.block_until_ready(conv_block(x, weight, bias))
    ref = jax.block_until_ready(reference(x, weight, bias))

    assert out.shape == (N, COUT, H, W)
    assert jnp.allclose(out, ref, atol=1e-3, rtol=1e-3), \
        f"max abs err {jnp.max(jnp.abs(out - ref))}"

    print("KERNEL_OK")
</pallas_src>

<mosaic_0001>
module attributes {stable_mosaic.version = 11 : i64} {
  func.func @conv_block_kernel(%arg0: i32, %arg1: memref<1x8x256xf32, #tpu.memory_space<vmem>>, %arg2: memref<8x72xf32, #tpu.memory_space<vmem>>, %arg3: memref<72x256xf32, #tpu.memory_space<vmem>>, %arg4: memref<1x8x256xf32, #tpu.memory_space<vmem>>) attributes {dimension_semantics = [#tpu.dimension_semantics<parallel>], iteration_bounds = array<i64: 2>, scalar_prefetch = 0 : i64, scratch_operands = 0 : i64, tpu.core_type = #tpu.core_type<tc>, window_params = [{transform_indices = @transform_0, window_bounds = array<i64: 1, 8, 256>}, {pipeline_mode = #tpu.pipeline_mode<synchronous>, transform_indices = @transform_1, window_bounds = array<i64: 8, 72>}, {pipeline_mode = #tpu.pipeline_mode<synchronous>, transform_indices = @transform_2, window_bounds = array<i64: 72, 256>}, {transform_indices = @transform_3, window_bounds = array<i64: 1, 8, 256>}]} {
    %c0 = arith.constant 0 : index
    %c0_0 = arith.constant 0 : index
    %0 = vector.load %arg2[%c0, %c0_0] : memref<8x72xf32, #tpu.memory_space<vmem>>, vector<8x72xf32>
    %c0_1 = arith.constant 0 : index
    %c0_2 = arith.constant 0 : index
    %1 = vector.load %arg3[%c0_1, %c0_2] : memref<72x256xf32, #tpu.memory_space<vmem>>, vector<72x256xf32>
    %c0_3 = arith.constant 0 : index
    %c0_4 = arith.constant 0 : index
    %c0_5 = arith.constant 0 : index
    %2 = vector.load %arg1[%c0_3, %c0_4, %c0_5] : memref<1x8x256xf32, #tpu.memory_space<vmem>>, vector<1x8x256xf32>
    %3 = vector.shape_cast %2 : vector<1x8x256xf32> to vector<8x256xf32>
    %c17_i32 = arith.constant 17 : i32
    %4 = tpu.dynamic_rotate %3 by %c17_i32 dim 1 : vector<8x256xf32>, i32 -> vector<8x256xf32>
    %c16_i32 = arith.constant 16 : i32
    %5 = tpu.dynamic_rotate %3 by %c16_i32 dim 1 : vector<8x256xf32>, i32 -> vector<8x256xf32>
    %c15_i32 = arith.constant 15 : i32
    %6 = tpu.dynamic_rotate %3 by %c15_i32 dim 1 : vector<8x256xf32>, i32 -> vector<8x256xf32>
    %c1_i32 = arith.constant 1 : i32
    %7 = tpu.dynamic_rotate %3 by %c1_i32 dim 1 : vector<8x256xf32>, i32 -> vector<8x256xf32>
    %c255_i32 = arith.constant 255 : i32
    %8 = tpu.dynamic_rotate %3 by %c255_i32 dim 1 : vector<8x256xf32>, i32 -> vector<8x256xf32>
    %c241_i32 = arith.constant 241 : i32
    %9 = tpu.dynamic_rotate %3 by %c241_i32 dim 1 : vector<8x256xf32>, i32 -> vector<8x256xf32>
    %c240_i32 = arith.constant 240 : i32
    %10 = tpu.dynamic_rotate %3 by %c240_i32 dim 1 : vector<8x256xf32>, i32 -> vector<8x256xf32>
    %c239_i32 = arith.constant 239 : i32
    %11 = tpu.dynamic_rotate %3 by %c239_i32 dim 1 : vector<8x256xf32>, i32 -> vector<8x256xf32>
    %12 = tpu.concatenate %4, %5, %6, %7, %3, %8, %9, %10, %11 in 0 : vector<8x256xf32>, vector<8x256xf32>, vector<8x256xf32>, vector<8x256xf32>, vector<8x256xf32>, vector<8x256xf32>, vector<8x256xf32>, vector<8x256xf32>, vector<8x256xf32> -> vector<72x256xf32>
    %13 = arith.mulf %12, %1 : vector<72x256xf32>
    %cst = arith.constant dense<0.000000e+00> : vector<8x256xf32>
    %14 = tpu.matmul %0, %13, %cst {dimension_numbers = #tpu.dot_dimension_numbers<[1], [0], [0], [1], [0, 0, 1, 1], [], []>} : vector<8x72xf32>, vector<72x256xf32>, vector<8x256xf32> -> vector<8x256xf32>
    %15 = arith.mulf %14, %14 : vector<8x256xf32>
    %16 = tpu.concatenate %14, %15 in 0 : vector<8x256xf32>, vector<8x256xf32> -> vector<16x256xf32>
    %cst_6 = arith.constant dense<0.000000e+00> : vector<16xf32>
    %17 = vector.multi_reduction <add>, %16, %cst_6 [1] : vector<16x256xf32> to vector<16xf32>
    %18 = vector.shape_cast %17 : vector<16xf32> to vector<16x1xf32>
    %cst_7 = arith.constant 3.906250e-03 : f32
    %19 = vector.broadcast %cst_7 : f32 to vector<16x1xf32>
    %20 = arith.mulf %18, %19 : vector<16x1xf32>
    %21 = vector.extract_strided_slice %20 {offsets = [0, 0], sizes = [8, 1], strides = [1, 1]} : vector<16x1xf32> to vector<8x1xf32>
    %22 = vector.extract_strided_slice %20 {offsets = [8, 0], sizes = [8, 1], strides = [1, 1]} : vector<16x1xf32> to vector<8x1xf32>
    %23 = arith.mulf %21, %21 : vector<8x1xf32>
    %24 = arith.subf %22, %23 : vector<8x1xf32>
    %25 = vector.broadcast %21 : vector<8x1xf32> to vector<8x256xf32>
    %26 = arith.subf %14, %25 : vector<8x256xf32>
    %cst_8 = arith.constant 9.99999974E-6 : f32
    %27 = vector.broadcast %cst_8 : f32 to vector<8x1xf32>
    %28 = arith.addf %24, %27 : vector<8x1xf32>
    %29 = math.rsqrt %28 : vector<8x1xf32>
    %30 = vector.broadcast %29 : vector<8x1xf32> to vector<8x256xf32>
    %31 = arith.mulf %26, %30 : vector<8x256xf32>
    %cst_9 = arith.constant 2.000000e-01 : f32
    %32 = vector.broadcast %cst_9 : f32 to vector<8x256xf32>
    %33 = arith.mulf %32, %31 : vector<8x256xf32>
    %34 = arith.maximumf %31, %33 : vector<8x256xf32>
    %c0_10 = arith.constant 0 : index
    %c0_11 = arith.constant 0 : index
    %c0_12 = arith.constant 0 : index
    %35 = vector.load %arg4[%c0_10, %c0_11, %c0_12] : memref<1x8x256xf32, #tpu.memory_space<vmem>>, vector<1x8x256xf32>
    %36 = vector.shape_cast %35 : vector<1x8x256xf32> to vector<8x256xf32>
    %37 = vector.shape_cast %34 : vector<8x256xf32> to vector<1x8x256xf32>
    tpu.vector_store %arg4[%c0_10, %c0_11, %c0_12], %37 {strides = array<i32>} : memref<1x8x256xf32, #tpu.memory_space<vmem>>, vector<1x8x256xf32>,
    return
  }
  func.func @transform_0(%arg0: i32) -> (i32, i32, i32) {
    %c0_i32 = arith.constant 0 : i32
    %c0_i32_0 = arith.constant 0 : i32
    %c0_i32_1 = arith.constant 0 : i32
    return %arg0, %c0_i32, %c0_i32_0 : i32, i32, i32
  }
  func.func @transform_1(%arg0: i32) -> (i32, i32) {
    %c0_i32 = arith.constant 0 : i32
    %c0_i32_0 = arith.constant 0 : i32
    %c0_i32_1 = arith.constant 0 : i32
    return %c0_i32, %c0_i32_0 : i32, i32
  }
  func.func @transform_2(%arg0: i32) -> (i32, i32) {
    %c0_i32 = arith.constant 0 : i32
    %c0_i32_0 = arith.constant 0 : i32
    %c0_i32_1 = arith.constant 0 : i32
    return %c0_i32, %c0_i32_0 : i32, i32
  }
  func.func @transform_3(%arg0: i32) -> (i32, i32, i32) {
    %c0_i32 = arith.constant 0 : i32
    %c0_i32_0 = arith.constant 0 : i32
    %c0_i32_1 = arith.constant 0 : i32
    return %arg0, %c0_i32, %c0_i32_0 : i32, i32, i32
  }
}

</mosaic_0001>

<llo_original>
// kernel: tpu_custom_call.1
$region0: #{tpu_custom_call.1}
  #allocation0 [shape = 'u32[]', space=smem, size = 0x4, offset = 0x4, fixed_abs, tag = 'smem constant byte address 0x4 - core index']
  #allocation1 [shape = 'u32[144,128]{1,0:T(1,128)}', space=vmem, size = 0x12000, scoped, tag = 'internal scratch']
  %s0 = inlined_call_operand.hbm [shape: f32[2,8,256], index: 0, kind: input, shape index: {}]
  %s1 = inlined_call_operand.hbm [shape: f32[8,72], index: 1, kind: input, shape index: {}]
  %s2 = inlined_call_operand.hbm [shape: f32[72,256], index: 2, kind: input, shape index: {}]
  %s3 = inlined_call_operand.hbm [shape: f32[2,8,256], index: 3, kind: output, shape index: {}]
  %s4 = sld [smem:[#allocation0]]
  $region57: #{tpu_custom_call.1} parent=0
    _
  %s6 = ssub.s32 1, %s4
  %s7 = scalar_select 0, %s6, %s4
  $region1: #{tpu_custom_call.1} parent=0
    #allocation2 [shape = 'u8[16384]{0}', space=vmem, size = 0x4000, scoped, tag = 'input window, operand 0']
    #allocation3 [shape = 's32[2]{0}', space=sflag, size = 0x8, scoped, tag = 'scoped memory for tpu_custom_call.1']
    #allocation4 [shape = 's32[2]{0}', space=sflag, size = 0x8, scoped, tag = 'scoped memory for tpu_custom_call.1']
    #allocation5 [shape = 'u8[4096]{0}', space=vmem, size = 0x1000, scoped, tag = 'input window, operand 1, single buffered']
    #allocation6 [shape = 's32[1]{0}', space=sflag, size = 0x4, scoped, tag = 'scoped memory for tpu_custom_call.1']
    #allocation7 [shape = 'u8[73728]{0}', space=vmem, size = 0x12000, scoped, tag = 'input window, operand 2, single buffered']
    #allocation8 [shape = 'u8[16384]{0}', space=vmem, size = 0x4000, scoped, tag = 'output window, operand 0']
    %8 = vsyncpa [#allocation3], 0
    %s9 = scalar_lea.sflag [#allocation3], 1
    %10 = vsyncpa %s9, 0
    %11 = vsyncpa [#allocation6], 0
    %12 = vsyncpa [#allocation4], 0
    %s13 = scalar_lea.sflag [#allocation4], 1
    %14 = vsyncpa %s13, 0
    loop: start=0, step=1, limit=4
    $region2: #{tpu_custom_call.1} parent=1 // loop_pre_header
      _
    $region3: #{tpu_custom_call.1} parent=1 // loop_header
      %s16 = sphi 0, %s20
      %p17 = scmp.ge.s32.totalorder %s16, 4
      %s26 = sphi 0, %s28
      %s29 = sphi 0, %s26
      %s30 = sphi 0, %s29
      %s46 = sphi 0, %s30
      %s50 = sphi 0, %s50
      %s52 = sphi 0, %s50
      %s53 = sphi 0, %s52
      %s67 = sphi 0, %s53
      %s71 = sphi 0, %s71
      %s73 = sphi 0, %s71
      %s74 = sphi 0, %s73
      %s88 = sphi 0, %s74
      %s94 = sphi 0, %s96
      %s97 = sphi 0, %s94
      %s98 = sphi 0, %s97
      %s114 = sphi 0, %s98
    $region4: #{tpu_custom_call.1} parent=1 // loop_header_branch
      %19 = sbr.rel (%p17) target = $region8
    $region5: #{tpu_custom_call.1} parent=1 // loop_body
      %s21 = ssub.s32 %s16, 1
      %s22 = ssub.s32 %s16, 2
      %s23 = sadd.s32 %s16, 1
      %s24 = ssub.s32 %s16, %s23
      %p25 = scmp.eq.s32.totalorder %s24, 0
      %s27 = sadd.s32 %s26, 1
      %s28 = scalar_select %p25, %s26, %s27
      %p31 = pneg %p25
      %p32 = scmp.eq.s32.totalorder %s16, 1
      %p33 = por %p31, %p32
      %p34 = scmp.ne.s32.totalorder %s26, %s29
      %p35 = scmp.eq.s32.totalorder %s16, 0
      %p36 = por %p34, %p35
      %p37 = scmp.ne.s32.totalorder %s26, %s29
      %p38 = scmp.eq.s32.totalorder %s21, 1
      %p39 = por %p37, %p38
      %p40 = scmp.ne.s32.totalorder %s29, %s30
      %p41 = scmp.eq.s32.totalorder %s21, 0
      %p42 = por %p40, %p41
      %p43 = scmp.ne.s32.totalorder %s29, %s30
      %p44 = scmp.eq.s32.totalorder %s22, 1
      %p45 = por %p43, %p44
      %p47 = scmp.ne.s32.totalorder %s30, %s46
      %p48 = scmp.eq.s32.totalorder %s22, 0
      %p49 = por %p47, %p48
      %s51 = sadd.s32 %s50, 1
      %p54 = scmp.eq.s32.totalorder %s16, 1
      %p55 = scmp.ne.s32.totalorder %s50, %s52
      %p56 = scmp.eq.s32.totalorder %s16, 0
      %p57 = por %p55, %p56
      %p58 = scmp.ne.s32.totalorder %s50, %s52
      %p59 = scmp.eq.s32.totalorder %s21, 1
      %p60 = por %p58, %p59
      %p61 = scmp.ne.s32.totalorder %s52, %s53
      %p62 = scmp.eq.s32.totalorder %s21, 0
      %p63 = por %p61, %p62
      %p64 = scmp.ne.s32.totalorder %s52, %s53
      %p65 = scmp.eq.s32.totalorder %s22, 1
      %p66 = por %p64, %p65
      %p68 = scmp.ne.s32.totalorder %s53, %s67
      %p69 = scmp.eq.s32.totalorder %s22, 0
      %p70 = por %p68, %p69
      %s72 = sadd.s32 %s71, 1
      %p75 = scmp.eq.s32.totalorder %s16, 1
      %p76 = scmp.ne.s32.totalorder %s71, %s73
      %p77 = scmp.eq.s32.totalorder %s16, 0
      %p78 = por %p76, %p77
      %p79 = scmp.ne.s32.totalorder %s71, %s73
      %p80 = scmp.eq.s32.totalorder %s21, 1
      %p81 = por %p79, %p80
      %p82 = scmp.ne.s32.totalorder %s73, %s74
      %p83 = scmp.eq.s32.totalorder %s21, 0
      %p84 = por %p82, %p83
      %p85 = scmp.ne.s32.totalorder %s73, %s74
      %p86 = scmp.eq.s32.totalorder %s22, 1
      %p87 = por %p85, %p86
      %p89 = scmp.ne.s32.totalorder %s74, %s88
      %p90 = scmp.eq.s32.totalorder %s22, 0
      %p91 = por %p89, %p90
      %s92 = ssub.s32 %s16, %s23
      %p93 = scmp.eq.s32.totalorder %s92, 0
      %s95 = sadd.s32 %s94, 1
      %s96 = scalar_select %p93, %s94, %s95
      %p99 = pneg %p93
      %p100 = scmp.eq.s32.totalorder %s16, 1
      %p101 = por %p99, %p100
      %p102 = scmp.ne.s32.totalorder %s94, %s97
      %p103 = scmp.eq.s32.totalorder %s16, 0
      %p104 = por %p102, %p103
      %p105 = scmp.ne.s32.totalorder %s94, %s97
      %p106 = scmp.eq.s32.totalorder %s21, 1
      %p107 = por %p105, %p106
      %p108 = scmp.ne.s32.totalorder %s97, %s98
      %p109 = scmp.eq.s32.totalorder %s21, 0
      %p110 = por %p108, %p109
      %p111 = scmp.ne.s32.totalorder %s97, %s98
      %p112 = scmp.eq.s32.totalorder %s22, 1
      %p113 = por %p111, %p112
      %p115 = scmp.ne.s32.totalorder %s98, %s114
      %p116 = scmp.eq.s32.totalorder %s22, 0
      %p117 = por %p115, %p116
      %p118 = scmp.le.s32.totalorder 1, %s16
      %p119 = scmp.lt.s32.totalorder %s16, 3
      %p120 = pnand %p118, %p119
      %p121 = pneg %p120
      // Predicated region
      $region9: #{tpu_custom_call.1} parent=5 // pred_check
        _
      $region10: #{tpu_custom_call.1} parent=5 // pred_check_branch
        %123 = sbr.rel (%p120) target = $region12
      $region11: #{tpu_custom_call.1} parent=5 // pred_region
        %s124 = ssub.s32 %s16, 1
        // Predicated region
        $region13: #{tpu_custom_call.1} parent=11 // pred_check
          %p125 = pneg %p63
        $region14: #{tpu_custom_call.1} parent=11 // pred_check_branch
          %127 = sbr.rel (%p125) target = $region16
        $region15: #{tpu_custom_call.1} parent=11 // pred_region
          %s129 = ssub.s32 128, 128
          %130 = vsyncadd [#allocation6], %s129
          %s132 = sshll.u32 [#allocation5], 4
          %s133 = int_to_ptr.vmem [resolvable:$true] %s132
          %135 = dma.hbm_to_vmem [thread:$0]  %s1, 128, %s133, [#allocation6]
        $region16: #{tpu_custom_call.1} parent=11 // pred_fallthru
          _
        // Predicated region
        $region17: #{tpu_custom_call.1} parent=11 // pred_check
          %p136 = pneg %p84
        $region18: #{tpu_custom_call.1} parent=11 // pred_check_branch
          %138 = sbr.rel (%p136) target = $region20
        $region19: #{tpu_custom_call.1} parent=11 // pred_region
          %s140 = ssub.s32 2304, 2304
          %141 = vsyncadd [#allocation6], %s140
          %s142 = sshll.u32 [#allocation7], 4
          %s143 = int_to_ptr.vmem [resolvable:$true] %s142
          %148 = dma.hbm_to_vmem [thread:$0]  %s2, 2304, %s143, [#allocation6], 256, 256, 16
        $region20: #{tpu_custom_call.1} parent=11 // pred_fallthru
          _
      $region12: #{tpu_custom_call.1} parent=5 // pred_fallthru
        _
      %p149 = scmp.lt.s32.totalorder %s16, 2
      // Predicated region
      $region21: #{tpu_custom_call.1} parent=5 // pred_check
        %p150 = pneg %p149
      $region22: #{tpu_custom_call.1} parent=5 // pred_check_branch
        %152 = sbr.rel (%p150) target = $region24
      $region23: #{tpu_custom_call.1} parent=5 // pred_region
        // Predicated region
        $region25: #{tpu_custom_call.1} parent=23 // pred_check
          %p153 = pneg %p36
        $region26: #{tpu_custom_call.1} parent=23 // pred_check_branch
          %155 = sbr.rel (%p153) target = $region28
        $region27: #{tpu_custom_call.1} parent=23 // pred_region
          %s156 = sand.u32 %s26, 1
          %s157 = scalar_lea.sflag [#allocation3], %s156
          %s158 = sand.u32 %s26, 1
          %s159 = smul.addr %s158, 16
          %s160 = scalar_lea.vmem [#allocation2], %s159
          %s162 = ssub.s32 256, 256
          %163 = vsyncadd %s157, %s162
          %s164 = smul.addr %s16, 2
          %s165 = smul.addr %s164, 128
          %s166 = scalar_lea.hbm %s0, %s165
          %s168 = sshll.u32 %s160, 4
          %s169 = int_to_ptr.vmem [resolvable:$true] %s168
          %171 = dma.hbm_to_vmem [thread:$0]  %s166, 256, %s169, %s157
        $region28: #{tpu_custom_call.1} parent=23 // pred_fallthru
          _
      $region24: #{tpu_custom_call.1} parent=5 // pred_fallthru
        _
      %p172 = scmp.le.s32.totalorder 1, %s16
      %p173 = scmp.lt.s32.totalorder %s16, 3
      %p174 = pnand %p172, %p173
      %p175 = pneg %p174
      // Predicated region
      $region29: #{tpu_custom_call.1} parent=5 // pred_check
        _
      $region30: #{tpu_custom_call.1} parent=5 // pred_check_branch
        %177 = sbr.rel (%p174) target = $region32
      $region31: #{tpu_custom_call.1} parent=5 // pred_region
        %s178 = ssub.s32 %s16, 1
        %s179 = sand.u32 %s29, 1
        %s180 = scalar_lea.sflag [#allocation3], %s179
        %s181 = sand.u32 %s29, 1
        %s182 = smul.addr %s181, 16
        %s183 = scalar_lea.vmem [#allocation2], %s182
        // Predicated region
        $region33: #{tpu_custom_call.1} parent=31 // pred_check
          %p184 = pneg %p42
        $region34: #{tpu_custom_call.1} parent=31 // pred_check_branch
          %186 = sbr.rel (%p184) target = $region36
        $region35: #{tpu_custom_call.1} parent=31 // pred_region
          %187 = dma.done %s180, 256
        $region36: #{tpu_custom_call.1} parent=31 // pred_fallthru
          _
        // Predicated region
        $region37: #{tpu_custom_call.1} parent=31 // pred_check
          %p188 = pneg %p63
        $region38: #{tpu_custom_call.1} parent=31 // pred_check_branch
          %190 = sbr.rel (%p188) target = $region40
        $region39: #{tpu_custom_call.1} parent=31 // pred_region
          %191 = dma.done [#allocation6], 128
        $region40: #{tpu_custom_call.1} parent=31 // pred_fallthru
          _
        // Predicated region
        $region41: #{tpu_custom_call.1} parent=31 // pred_check
          %p192 = pneg %p84
        $region42: #{tpu_custom_call.1} parent=31 // pred_check_branch
          %194 = sbr.rel (%p192) target = $region44
        $region43: #{tpu_custom_call.1} parent=31 // pred_region
          %195 = dma.done [#allocation6], 2304
        $region44: #{tpu_custom_call.1} parent=31 // pred_fallthru
          _
        %s196 = sand.u32 %s29, 1
        %s197 = scalar_lea.sflag [#allocation3], %s196
        %s198 = sand.u32 %s29, 1
        %s199 = smul.addr %s198, 16
        %s200 = scalar_lea.vmem [#allocation2], %s199
        %p201 = pneg %p42
        %p202 = pneg %p39
        %p203 = pneg %p63
        %p204 = pneg %p60
        %p205 = pneg %p84
        %p206 = pneg %p81
        %p207 = pneg %p110
        %p208 = pneg %p107
        %s209 = sand.u32 %s97, 1
        %s210 = scalar_lea.sflag [#allocation4], %s209
        %s211 = sand.u32 %s97, 1
        %s212 = smul.addr %s211, 16
        %s213 = scalar_lea.vmem [#allocation8], %s212
        %v214 = vld [vmem:[#allocation5] sm:$0xff]
        %v215 = vld [vmem:[#allocation7] sm:$0xff]
        %v216 = vld [vmem:[#allocation7 + $0x8] sm:$0xff]
        %v217 = vld [vmem:[#allocation7 + $0x10] sm:$0xff]
        %v218 = vld [vmem:[#allocation7 + $0x18] sm:$0xff]
        %v219 = vld [vmem:[#allocation7 + $0x20] sm:$0xff]
        %v220 = vld [vmem:[#allocation7 + $0x28] sm:$0xff]
        %v221 = vld [vmem:[#allocation7 + $0x30] sm:$0xff]
        %v222 = vld [vmem:[#allocation7 + $0x38] sm:$0xff]
        %v223 = vld [vmem:[#allocation7 + $0x40] sm:$0xff]
        %v224 = vld [vmem:[#allocation7 + $0x48] sm:$0xff]
        %v225 = vld [vmem:[#allocation7 + $0x50] sm:$0xff]
        %v226 = vld [vmem:[#allocation7 + $0x58] sm:$0xff]
        %v227 = vld [vmem:[#allocation7 + $0x60] sm:$0xff]
        %v228 = vld [vmem:[#allocation7 + $0x68] sm:$0xff]
        %v229 = vld [vmem:[#allocation7 + $0x70] sm:$0xff]
        %v230 = vld [vmem:[#allocation7 + $0x78] sm:$0xff]
        %v231 = vld [vmem:[#allocation7 + $0x80] sm:$0xff]
        %v232 = vld [vmem:[#allocation7 + $0x88] sm:$0xff]
        %v233 = vld [vmem:[%s183] sm:$0xff]
        %v234 = vld [vmem:[%s183 + $0x8] sm:$0xff]
        %235 = vrot.lane.b32.xlu0 %v233, 17
        %v236 = vpop.permute.xlu0 %235
        %237 = vrot.lane.b32.xlu0 %v234, 17
        %v238 = vpop.permute.xlu0 %237
        %v239 = vlaneseq
        %v240 = vand.u32 %v239, 127
        %vm241 = vcmp.lt.s32.totalorder %v240, 17
        %v242 = vsel %vm241, %v236, %v238
        %v243 = vsel %vm241, %v238, %v236
        %244 = vrot.lane.b32.xlu0 %v233, 16
        %v245 = vpop.permute.xlu0 %244
        %246 = vrot.lane.b32.xlu0 %v234, 16
        %v247 = vpop.permute.xlu0 %246
        %vm248 = vcmp.lt.s32.totalorder %v240, 16
        %v249 = vsel %vm248, %v245, %v247
        %v250 = vsel %vm248, %v247, %v245
        %251 = vrot.lane.b32.xlu0 %v233, 15
        %v252 = vpop.permute.xlu0 %251
        %253 = vrot.lane.b32.xlu0 %v234, 15
        %v254 = vpop.permute.xlu0 %253
        %vm255 = vcmp.lt.s32.totalorder %v240, 15
        %v256 = vsel %vm255, %v252, %v254
        %v257 = vsel %vm255, %v254, %v252
        %258 = vrot.lane.b32.xlu0 %v233, 1
        %v259 = vpop.permute.xlu0 %258
        %260 = vrot.lane.b32.xlu0 %v234, 1
        %v261 = vpop.permute.xlu0 %260
        %vm262 = vcmp.lt.s32.totalorder %v240, 1
        %v263 = vsel %vm262, %v259, %v261
        %v264 = vsel %vm262, %v261, %v259
        %265 = vrot.lane.b32.xlu0 %v233, 127
        %v266 = vpop.permute.xlu0 %265
        %267 = vrot.lane.b32.xlu0 %v234, 127
        %v268 = vpop.permute.xlu0 %267
        %vm269 = vcmp.lt.s32.totalorder %v240, 127
        %v270 = vsel %vm269, %v266, %v268
        %v271 = vsel %vm269, %v268, %v266
        %272 = vrot.lane.b32.xlu0 %v233, 113
        %v273 = vpop.permute.xlu0 %272
        %274 = vrot.lane.b32.xlu0 %v234, 113
        %v275 = vpop.permute.xlu0 %274
        %vm276 = vcmp.lt.s32.totalorder %v240, 113
        %v277 = vsel %vm276, %v273, %v275
        %v278 = vsel %vm276, %v275, %v273
        %279 = vrot.lane.b32.xlu0 %v233, 112
        %v280 = vpop.permute.xlu0 %279
        %281 = vrot.lane.b32.xlu0 %v234, 112
        %v282 = vpop.permute.xlu0 %281
        %vm283 = vcmp.lt.s32.totalorder %v240, 112
        %v284 = vsel %vm283, %v280, %v282
        %v285 = vsel %vm283, %v282, %v280
        %286 = vrot.lane.b32.xlu0 %v233, 111
        %v287 = vpop.permute.xlu0 %286
        %288 = vrot.lane.b32.xlu0 %v234, 111
        %v289 = vpop.permute.xlu0 %288
        %vm290 = vcmp.lt.s32.totalorder %v240, 111
        %v291 = vsel %vm290, %v287, %v289
        %v292 = vsel %vm290, %v289, %v287
        %v293 = vmul.f32 %v243, %v215
        %v294 = vmul.f32 %v242, %v216
        %v295 = vmul.f32 %v250, %v217
        %v296 = vmul.f32 %v249, %v218
        %v297 = vmul.f32 %v257, %v219
        %v298 = vmul.f32 %v256, %v220
        %v299 = vmul.f32 %v264, %v221
        %v300 = vmul.f32 %v263, %v222
        %v301 = vmul.f32 %v233, %v223
        %v302 = vmul.f32 %v234, %v224
        %v303 = vmul.f32 %v270, %v225
        %v304 = vmul.f32 %v271, %v226
        %v305 = vmul.f32 %v277, %v227
        %v306 = vmul.f32 %v278, %v228
        %v307 = vmul.f32 %v284, %v229
        %v308 = vmul.f32 %v285, %v230
        %v309 = vmul.f32 %v291, %v231
        %v310 = vmul.f32 %v292, %v232
        %vm311 = vcmask 588800
        %v313 = vsel %vm311, %v214, 0
        %315 = vmatprep.subr.mxu0 %v294
        %316 = vmatpush1.msra.mxu0 %v293
        %317 = vmatprep.subr.mxu0 %v296
        %318 = vmatpush1.msra.mxu0 %v295
        %319 = vmatprep.subr.mxu0 %v298
        %320 = vmatpush1.msra.mxu0 %v297
        %321 = vmatprep.subr.mxu0 %v300
        %322 = vmatpush1.msra.mxu0 %v299
        %323 = vmatprep.subr.mxu0 %v302
        %324 = vmatpush1.msra.mxu0 %v301
        %325 = vmatprep.subr.mxu0 %v304
        %326 = vmatpush1.msra.mxu0 %v303
        %327 = vmatprep.subr.mxu0 %v306
        %328 = vmatpush1.msra.mxu0 %v305
        %329 = vmatprep.subr.mxu0 %v308
        %330 = vmatpush1.msra.mxu0 %v307
        %331 = vmatprep.subr.mxu0 %v310
        %332 = vmatpush1.msra.mxu0 %v309
        %333 = vmatprep.subr.mxu0 0.0
        %334 = vmatpush1.msra.mxu0 0.0
        %335 = vmatprep.subr.mxu0 0.0
        %336 = vmatpush1.msra.mxu0 0.0
        %337 = vmatprep.subr.mxu0 0.0
        %338 = vmatpush1.msra.mxu0 0.0
        %339 = vmatprep.subr.mxu0 0.0
        %340 = vmatpush1.msra.mxu0 0.0
        %341 = vmatprep.subr.mxu0 0.0
        %342 = vmatpush1.msra.mxu0 0.0
        %343 = vmatprep.subr.mxu0 0.0
        %344 = vmatpush1.msra.mxu0 0.0
        %345 = vmatprep.subr.mxu0 0.0
        %346 = vmatpush1.msra.mxu0 0.0
        %347 = vmatprep.subr.mxu0 0.0
        %348 = vmatpush1.msra.mxu0 0.0
        %349 = vmatprep.subr.mxu0 0.0
        %350 = vmatpush1.msra.mxu0 0.0
        %351 = vmatprep.subr.mxu0 0.0
        %352 = vmatpush1.msra.mxu0 0.0
        %353 = vmatprep.subr.mxu0 0.0
        %354 = vmatpush1.msra.mxu0 0.0
        %355 = vmatprep.subr.mxu0 0.0
        %356 = vmatpush1.msra.mxu0 0.0
        %357 = vmatprep.subr.mxu0 0.0
        %358 = vmatpush1.msra.mxu0 0.0
        %359 = vmatprep.subr.mxu0 0.0
        %360 = vmatpush1.msra.mxu0 0.0
        %361 = vmatprep.subr.mxu0 0.0
        %362 = vmatpush1.msra.mxu0 0.0
        %363 = vmatprep.subr.mxu0 0.0
        %364 = vmatpush1.msra.mxu0 0.0
        %365 = vmatprep.subr.mxu0 0.0
        %366 = vmatpush1.msra.mxu0 0.0
        %367 = vmatprep.subr.mxu0 0.0
        %368 = vmatpush1.msra.mxu0 0.0
        %369 = vmatprep.subr.mxu0 0.0
        %370 = vmatpush1.msra.mxu0 0.0
        %371 = vmatprep.subr.mxu0 0.0
        %372 = vmatpush1.msra.mxu0 0.0
        %373 = vmatprep.subr.mxu0 0.0
        %374 = vmatpush1.msra.mxu0 0.0
        %375 = vmatprep.subr.mxu0 0.0
        %376 = vmatpush1.msra.mxu0 0.0
        %377 = vmatprep.subr.mxu0 0.0
        %378 = vmatpush1.msra.mxu0 0.0
        %379 = vmatprep.mubr.f32.mxu0 0.0
        %380 = vmatmul.mubr.f32.gmra.mrb[0].mxu0 %v313
        %v381 = vpop.f32.mrb[0].mxu0
        %v382 = vadd.f32 0.0, %v381
        %v383 = vpop.f32.mrb[0].mxu0
        %v384 = vadd.f32 0.0, %v383
        %385 = vdwg.mxu0
        %v386 = vmul.f32 %v382, %v382
        %v387 = vmul.f32 %v384, %v384
        %v388 = vadd.f32 %v382, %v384
        %389 = vadd.xlane.f32.xlu0 %v388
        %v390 = vpop.xlane.xlu0 %389
        %v391 = vadd.f32 %v386, %v387
        %392 = vadd.xlane.f32.xlu0 %v391
        %v393 = vpop.xlane.xlu0 %392
        %v394 = vmul.f32 %v390, 0.00390625
        %v395 = vmul.f32 %v393, 0.00390625
        %v396 = vmul.f32 %v394, %v394
        %v397 = vsub.f32 %v395, %v396
        %v398 = vsub.f32 %v382, %v394
        %v399 = vsub.f32 %v384, %v394
        %v400 = vadd.f32 %v397, 1e-05
        %v401 = vrsqrt.pop %v400
        %v402 = vmul.f32 %v398, %v401
        %v403 = vmul.f32 %v399, %v401
        %v404 = vmul.f32 %v402, 0.2
        %v405 = vmul.f32 %v403, 0.2
        %v406 = vmax.f32 %v402, %v404
        %v407 = vmax.f32 %v403, %v405
        %408 = vst [vmem:[%s213] sm:$0xff] %v406
        %409 = vst [vmem:[%s213 + $0x8] sm:$0xff] %v407
        %s410 = sand.u32 %s97, 1
        %s411 = scalar_lea.sflag [#allocation4], %s410
        %s412 = sand.u32 %s97, 1
        %s413 = smul.addr %s412, 16
        %s414 = scalar_lea.vmem [#allocation8], %s413
        // Predicated region
        $region45: #{tpu_custom_call.1} parent=31 // pred_check
          %p415 = pneg %p107
        $region46: #{tpu_custom_call.1} parent=31 // pred_check_branch
          %417 = sbr.rel (%p415) target = $region48
        $region47: #{tpu_custom_call.1} parent=31 // pred_region
          %s419 = ssub.s32 256, 256
          %420 = vsyncadd %s411, %s419
          %s421 = smul.addr %s21, 2
          %s422 = smul.addr %s421, 128
          %s423 = scalar_lea.hbm %s3, %s422
          %s425 = sshll.u32 %s414, 4
          %s426 = int_to_ptr.vmem [resolvable:$true] %s425
          %428 = dma.vmem_to_hbm [thread:$0]  %s426, 256, %s423, %s411
        $region48: #{tpu_custom_call.1} parent=31 // pred_fallthru
          _
      $region32: #{tpu_custom_call.1} parent=5 // pred_fallthru
        _
      %p429 = scmp.le.s32.totalorder 2, %s16
      // Predicated region
      $region49: #{tpu_custom_call.1} parent=5 // pred_check
        %p430 = pneg %p429
      $region50: #{tpu_custom_call.1} parent=5 // pred_check_branch
        %432 = sbr.rel (%p430) target = $region52
      $region51: #{tpu_custom_call.1} parent=5 // pred_region
        %s433 = ssub.s32 %s16, 2
        // Predicated region
        $region53: #{tpu_custom_call.1} parent=51 // pred_check
          %p434 = pneg %p113
        $region54: #{tpu_custom_call.1} parent=51 // pred_check_branch
          %436 = sbr.rel (%p434) target = $region56
        $region55: #{tpu_custom_call.1} parent=51 // pred_region
          %s437 = sand.u32 %s98, 1
          %s438 = scalar_lea.sflag [#allocation4], %s437
          %s439 = sand.u32 %s98, 1
          %s440 = smul.addr %s439, 16
          %s441 = scalar_lea.vmem [#allocation8], %s440
          %442 = dma.done %s438, 256
        $region56: #{tpu_custom_call.1} parent=51 // pred_fallthru
          _
      $region52: #{tpu_custom_call.1} parent=5 // pred_fallthru
        _
    $region6: #{tpu_custom_call.1} parent=1 // loop_footer
      %s20 = sadd.s32 1, %s16
    $region7: #{tpu_custom_call.1} parent=1 // loop_footer_branch
      %15 = sbr.rel target = $region3
    $region8: #{tpu_custom_call.1} parent=1 // loop_exit
      _
    %443 = vsyncpa [#allocation3], 1
    %s444 = scalar_lea.sflag [#allocation3], 1
    %445 = vsyncpa %s444, 1
    %446 = vsyncpa [#allocation6], 1
    %447 = vsyncpa [#allocation4], 1
    %s448 = scalar_lea.sflag [#allocation4], 1
    %449 = vsyncpa %s448, 1

</llo_original>
